<compile_context>
chip_gen: v5e
topology: v5e:2x2
jax: 0.10.0
libtpu: 0.0.40
codegen_flags: <defaults>
</compile_context>

<pallas_src>
import functools
import math

import jax
import jax.numpy as jnp
from jax.experimental import pallas as pl
from jax.experimental.pallas import tpu as pltpu


def _gelu_exact(x):
    # PyTorch's default F.gelu is the exact erf-based formulation.
    return 0.5 * x * (1.0 + jax.lax.erf(x * (1.0 / math.sqrt(2.0))))


def _round_up(x, m):
    return (x + m - 1) // m * m


def _pick_m_chunk(M):
    # Largest lane-friendly chunk of the mlp_dim that divides it evenly.
    for c in (512, 256, 128):
        if M % c == 0:
            return c
    return M


def mlp_kernel(x_ref, w1_ref, b1_ref, w2_ref, b2_ref, o_ref, *, m_chunk):
    # One token tile (tm, H) in VMEM; weights fully resident.
    x = x_ref[...]
    M = w1_ref.shape[1]
    acc = jnp.zeros(o_ref.shape, jnp.float32)
    # Fused fc1 -> gelu -> fc2 per M-chunk: keeps the intermediate at
    # (tm, m_chunk) instead of (tm, M).  Offsets are static Python ints, so
    # the ref slices are free views.
    for c0 in range(0, M, m_chunk):
        h = jnp.dot(x, w1_ref[:, c0:c0 + m_chunk],
                    preferred_element_type=jnp.float32)
        h = h + b1_ref[:, c0:c0 + m_chunk]          # bias kept in f32
        h = _gelu_exact(h)                           # erf on the EUP
        # TODO(synk): dropout is identity (inference); training-mode dropout
        #             would use pltpu.prng_seed / pltpu.prng_random_bits here.
        h = h.astype(x.dtype)                        # MXU-friendly dtype for fc2
        acc = acc + jnp.dot(h, w2_ref[c0:c0 + m_chunk, :],
                            preferred_element_type=jnp.float32)
    o_ref[...] = (acc + b2_ref[...]).astype(o_ref.dtype)


def _build_mlp_call(*, N_pad, H, M, tm, dtype, m_chunk, single_buffer_weights):
    def wspec(shape):
        kwargs = {}
        if single_buffer_weights:
            # Constant index_map -> double buffering is pure VMEM waste.
            kwargs["pipeline_mode"] = pl.Buffered(1)
        return pl.BlockSpec(shape, lambda i: (0,) * len(shape), **kwargs)

    itemsize = jnp.dtype(dtype).itemsize
    wbuf = 1 if single_buffer_weights else 2
    needed = (
        2 * tm * H * itemsize                        # x tiles (double-buffered)
        + 2 * tm * H * itemsize                      # out tiles
        + wbuf * (H * M + M * H) * itemsize          # fc1 / fc2 weights
        + wbuf * (M + H) * 4                         # f32 biases
        + tm * H * 4                                 # f32 accumulator
        + tm * m_chunk * (4 + itemsize)              # per-chunk h (f32 + cast)
    )
    vmem_limit = int(min(max(2 * needed, 32 << 20), 100 << 20))

    cost = pl.CostEstimate(
        flops=2 * 2 * N_pad * H * M,                 # two matmuls
        transcendentals=N_pad * M,                   # erf per hidden element
        bytes_accessed=(2 * N_pad * H + 2 * H * M + M + H) * itemsize,
    )

    kernel = functools.partial(mlp_kernel, m_chunk=m_chunk)
    return pl.pallas_call(
        kernel,
        out_shape=jax.ShapeDtypeStruct((N_pad, H), dtype),
        grid_spec=pltpu.PrefetchScalarGridSpec(
            num_scalar_prefetch=0,
            grid=(N_pad // tm,),
            in_specs=[
                pl.BlockSpec((tm, H), lambda i: (i, 0)),   # x tile (tokens)
                wspec((H, M)),                             # fc1 weight (resident)
                wspec((1, M)),                             # fc1 bias (f32)
                wspec((M, H)),                             # fc2 weight (resident)
                wspec((1, H)),                             # fc2 bias (f32)
            ],
            out_specs=pl.BlockSpec((tm, H), lambda i: (i, 0)),
        ),
        compiler_params=pltpu.CompilerParams(
            dimension_semantics=("parallel",),
            vmem_limit_bytes=vmem_limit,
        ),
        cost_estimate=cost,
    )


def mlp_forward(x, w1, b1, w2, b2, *, tm=256):
    """x: (B, S, H);  w1: (H, M), b1: (M,);  w2: (M, H), b2: (H,)."""
    B, S, H = x.shape
    M = w1.shape[1]
    N = B * S
    x2 = x.reshape(N, H)

    # Token tile: 256 fills the v6e/v7x MXU (and is a multiple of 128 for v5e);
    # shrink (to a multiple of 8) for tiny inputs, pad N up to a tile multiple.
    tm = max(8, min(tm, _round_up(N, 8)))
    N_pad = _round_up(N, tm)
    if N_pad != N:
        x2 = jnp.pad(x2, ((0, N_pad - N), (0, 0)))

    # Biases in f32 so the 1e-6-scale init survives bf16 parameter storage.
    b1_2d = b1.reshape(1, M).astype(jnp.float32)
    b2_2d = b2.reshape(1, H).astype(jnp.float32)

    m_chunk = _pick_m_chunk(M)
    call_kwargs = dict(N_pad=N_pad, H=H, M=M, tm=tm, dtype=x.dtype,
                       m_chunk=m_chunk)

    try:
        out = _build_mlp_call(single_buffer_weights=True, **call_kwargs)(
            x2, w1, b1_2d, w2, b2_2d)
        out = jax.block_until_ready(out)
    except Exception:
        # pipeline_mode=pl.Buffered(1) unsupported on this jax/libtpu combo;
        # fall back to default double-buffered weights (correct, more VMEM).
        out = _build_mlp_call(single_buffer_weights=False, **call_kwargs)(
            x2, w1, b1_2d, w2, b2_2d)

    return out[:N].reshape(B, S, H)


def xavier_uniform(key, fan_in, fan_out, dtype=jnp.float32):
    limit = math.sqrt(6.0 / (fan_in + fan_out))
    return jax.random.uniform(key, (fan_in, fan_out), dtype,
                              minval=-limit, maxval=limit)


def _reference(x, w1, b1, w2, b2):
    ref = jnp.einsum("bsh,hm->bsm", x, w1) + b1
    ref = _gelu_exact(ref)
    ref = jnp.einsum("bsm,mh->bsh", ref, w2) + b2
    return ref


if __name__ == "__main__":
    # Small config consistent with the module: hidden_size=32, mlp_dim=128.
    batch, seq, hidden, mlp_dim = 2, 8, 32, 128

    key = jax.random.PRNGKey(0)
    kx, kw1, kb1, kw2, kb2 = jax.random.split(key, 5)

    x = jax.random.normal(kx, (batch, seq, hidden), jnp.float32)

    # Deterministic parameter init mirroring Mlp._init_weights():
    #   xavier_uniform on weights, normal(std=1e-6) on biases.
    w1 = xavier_uniform(kw1, hidden, mlp_dim)
    b1 = 1e-6 * jax.random.normal(kb1, (mlp_dim,), jnp.float32)
    w2 = xavier_uniform(kw2, mlp_dim, hidden)
    b2 = 1e-6 * jax.random.normal(kb2, (hidden,), jnp.float32)

    y = mlp_forward(x, w1, b1, w2, b2)
    jax.block_until_ready(y)
    ref = _reference(x, w1, b1, w2, b2)
    assert jnp.allclose(y, ref, atol=1e-5, rtol=1e-5), "mismatch vs JAX reference"

    # Also exercise the non-divisible-token / padding path.
    seq2 = 11
    x2 = jax.random.normal(jax.random.PRNGKey(1), (batch, seq2, hidden),
                           jnp.float32)
    y2 = mlp_forward(x2, w1, b1, w2, b2)
    jax.block_until_ready(y2)
    ref2 = _reference(x2, w1, b1, w2, b2)
    assert jnp.allclose(y2, ref2, atol=1e-5, rtol=1e-5), "padded-path mismatch"

    print("KERNEL_OK")
</pallas_src>

<mosaic_0001>
module attributes {stable_mosaic.version = 11 : i64} {
  func.func @mlp_kernel(%arg0: i32, %arg1: memref<16x32xf32, #tpu.memory_space<vmem>>, %arg2: memref<32x128xf32, #tpu.memory_space<vmem>>, %arg3: memref<1x128xf32, #tpu.memory_space<vmem>>, %arg4: memref<128x32xf32, #tpu.memory_space<vmem>>, %arg5: memref<1x32xf32, #tpu.memory_space<vmem>>, %arg6: memref<16x32xf32, #tpu.memory_space<vmem>>) attributes {dimension_semantics = [#tpu.dimension_semantics<parallel>], iteration_bounds = array<i64: 1>, scalar_prefetch = 0 : i64, scratch_operands = 0 : i64, tpu.core_type = #tpu.core_type<tc>, window_params = [{transform_indices = @transform_0, window_bounds = array<i64: 16, 32>}, {pipeline_mode = #tpu.pipeline_mode<synchronous>, transform_indices = @transform_1, window_bounds = array<i64: 32, 128>}, {pipeline_mode = #tpu.pipeline_mode<synchronous>, transform_indices = @transform_2, window_bounds = array<i64: 1, 128>}, {pipeline_mode = #tpu.pipeline_mode<synchronous>, transform_indices = @transform_3, window_bounds = array<i64: 128, 32>}, {pipeline_mode = #tpu.pipeline_mode<synchronous>, transform_indices = @transform_4, window_bounds = array<i64: 1, 32>}, {transform_indices = @transform_5, window_bounds = array<i64: 16, 32>}]} {
    %c0 = arith.constant 0 : index
    %c0_0 = arith.constant 0 : index
    %0 = vector.load %arg1[%c0, %c0_0] : memref<16x32xf32, #tpu.memory_space<vmem>>, vector<16x32xf32>
    %cst = arith.constant 0.000000e+00 : f32
    %1 = vector.broadcast %cst : f32 to vector<16x32xf32>
    %c0_1 = arith.constant 0 : index
    %c0_2 = arith.constant 0 : index
    %2 = vector.load %arg2[%c0_1, %c0_2] : memref<32x128xf32, #tpu.memory_space<vmem>>, vector<32x128xf32>
    %cst_3 = arith.constant dense<0.000000e+00> : vector<16x128xf32>
    %3 = tpu.matmul %0, %2, %cst_3 {dimension_numbers = #tpu.dot_dimension_numbers<[1], [0], [0], [1], [0, 0, 1, 1], [], []>} : vector<16x32xf32>, vector<32x128xf32>, vector<16x128xf32> -> vector<16x128xf32>
    %c0_4 = arith.constant 0 : index
    %c0_5 = arith.constant 0 : index
    %4 = vector.load %arg3[%c0_4, %c0_5] : memref<1x128xf32, #tpu.memory_space<vmem>>, vector<1x128xf32>
    %5 = vector.broadcast %4 : vector<1x128xf32> to vector<16x128xf32>
    %6 = arith.addf %3, %5 : vector<16x128xf32>
    %cst_6 = arith.constant 5.000000e-01 : f32
    %7 = vector.broadcast %cst_6 : f32 to vector<16x128xf32>
    %8 = arith.mulf %7, %6 : vector<16x128xf32>
    %cst_7 = arith.constant 0.707106769 : f32
    %9 = vector.broadcast %cst_7 : f32 to vector<16x128xf32>
    %10 = arith.mulf %6, %9 : vector<16x128xf32>
    %11 = math.erf %10 : vector<16x128xf32>
    %cst_8 = arith.constant 1.000000e+00 : f32
    %12 = vector.broadcast %cst_8 : f32 to vector<16x128xf32>
    %13 = arith.addf %12, %11 : vector<16x128xf32>
    %14 = arith.mulf %8, %13 : vector<16x128xf32>
    %c0_9 = arith.constant 0 : index
    %c0_10 = arith.constant 0 : index
    %15 = vector.load %arg4[%c0_9, %c0_10] : memref<128x32xf32, #tpu.memory_space<vmem>>, vector<128x32xf32>
    %cst_11 = arith.constant dense<0.000000e+00> : vector<16x32xf32>
    %16 = tpu.matmul %14, %15, %cst_11 {dimension_numbers = #tpu.dot_dimension_numbers<[1], [0], [0], [1], [0, 0, 1, 1], [], []>} : vector<16x128xf32>, vector<128x32xf32>, vector<16x32xf32> -> vector<16x32xf32>
    %17 = arith.addf %1, %16 : vector<16x32xf32>
    %c0_12 = arith.constant 0 : index
    %c0_13 = arith.constant 0 : index
    %18 = vector.load %arg5[%c0_12, %c0_13] : memref<1x32xf32, #tpu.memory_space<vmem>>, vector<1x32xf32>
    %19 = vector.broadcast %18 : vector<1x32xf32> to vector<16x32xf32>
    %20 = arith.addf %17, %19 : vector<16x32xf32>
    %c0_14 = arith.constant 0 : index
    %c0_15 = arith.constant 0 : index
    %21 = vector.load %arg6[%c0_14, %c0_15] : memref<16x32xf32, #tpu.memory_space<vmem>>, vector<16x32xf32>
    tpu.vector_store %arg6[%c0_14, %c0_15], %20 {strides = array<i32>} : memref<16x32xf32, #tpu.memory_space<vmem>>, vector<16x32xf32>,
    return
  }
  func.func @transform_0(%arg0: i32) -> (i32, i32) {
    %c0_i32 = arith.constant 0 : i32
    %c0_i32_0 = arith.constant 0 : i32
    return %arg0, %c0_i32 : i32, i32
  }
  func.func @transform_1(%arg0: i32) -> (i32, i32) {
    %c0_i32 = arith.constant 0 : i32
    %c0_i32_0 = arith.constant 0 : i32
    %c0_i32_1 = arith.constant 0 : i32
    return %c0_i32, %c0_i32_0 : i32, i32
  }
  func.func @transform_2(%arg0: i32) -> (i32, i32) {
    %c0_i32 = arith.constant 0 : i32
    %c0_i32_0 = arith.constant 0 : i32
    %c0_i32_1 = arith.constant 0 : i32
    return %c0_i32, %c0_i32_0 : i32, i32
  }
  func.func @transform_3(%arg0: i32) -> (i32, i32) {
    %c0_i32 = arith.constant 0 : i32
    %c0_i32_0 = arith.constant 0 : i32
    %c0_i32_1 = arith.constant 0 : i32
    return %c0_i32, %c0_i32_0 : i32, i32
  }
  func.func @transform_4(%arg0: i32) -> (i32, i32) {
    %c0_i32 = arith.constant 0 : i32
    %c0_i32_0 = arith.constant 0 : i32
    %c0_i32_1 = arith.constant 0 : i32
    return %c0_i32, %c0_i32_0 : i32, i32
  }
  func.func @transform_5(%arg0: i32) -> (i32, i32) {
    %c0_i32 = arith.constant 0 : i32
    %c0_i32_0 = arith.constant 0 : i32
    return %arg0, %c0_i32 : i32, i32
  }
}

module attributes {stable_mosaic.version = 11 : i64} {
  func.func @mlp_kernel(%arg0: i32, %arg1: memref<16x32xf32, #tpu.memory_space<vmem>>, %arg2: memref<32x128xf32, #tpu.memory_space<vmem>>, %arg3: memref<1x128xf32, #tpu.memory_space<vmem>>, %arg4: memref<128x32xf32, #tpu.memory_space<vmem>>, %arg5: memref<1x32xf32, #tpu.memory_space<vmem>>, %arg6: memref<16x32xf32, #tpu.memory_space<vmem>>) attributes {dimension_semantics = [#tpu.dimension_semantics<parallel>], iteration_bounds = array<i64: 1>, scalar_prefetch = 0 : i64, scratch_operands = 0 : i64, tpu.core_type = #tpu.core_type<tc>, window_params = [{transform_indices = @transform_0, window_bounds = array<i64: 16, 32>}, {pipeline_mode = #tpu.pipeline_mode<synchronous>, transform_indices = @transform_1, window_bounds = array<i64: 32, 128>}, {pipeline_mode = #tpu.pipeline_mode<synchronous>, transform_indices = @transform_2, window_bounds = array<i64: 1, 128>}, {pipeline_mode = #tpu.pipeline_mode<synchronous>, transform_indices = @transform_3, window_bounds = array<i64: 128, 32>}, {pipeline_mode = #tpu.pipeline_mode<synchronous>, transform_indices = @transform_4, window_bounds = array<i64: 1, 32>}, {transform_indices = @transform_5, window_bounds = array<i64: 16, 32>}]} {
    %c0 = arith.constant 0 : index
    %c0_0 = arith.constant 0 : index
    %0 = vector.load %arg1[%c0, %c0_0] : memref<16x32xf32, #tpu.memory_space<vmem>>, vector<16x32xf32>
    %cst = arith.constant 0.000000e+00 : f32
    %1 = vector.broadcast %cst : f32 to vector<16x32xf32>
    %c0_1 = arith.constant 0 : index
    %c0_2 = arith.constant 0 : index
    %2 = vector.load %arg2[%c0_1, %c0_2] : memref<32x128xf32, #tpu.memory_space<vmem>>, vector<32x128xf32>
    %cst_3 = arith.constant dense<0.000000e+00> : vector<16x128xf32>
    %3 = tpu.matmul %0, %2, %cst_3 {dimension_numbers = #tpu.dot_dimension_numbers<[1], [0], [0], [1], [0, 0, 1, 1], [], []>} : vector<16x32xf32>, vector<32x128xf32>, vector<16x128xf32> -> vector<16x128xf32>
    %c0_4 = arith.constant 0 : index
    %c0_5 = arith.constant 0 : index
    %4 = vector.load %arg3[%c0_4, %c0_5] : memref<1x128xf32, #tpu.memory_space<vmem>>, vector<1x128xf32>
    %5 = vector.broadcast %4 : vector<1x128xf32> to vector<16x128xf32>
    %6 = arith.addf %3, %5 : vector<16x128xf32>
    %cst_6 = arith.constant 5.000000e-01 : f32
    %7 = vector.broadcast %cst_6 : f32 to vector<16x128xf32>
    %8 = arith.mulf %7, %6 : vector<16x128xf32>
    %cst_7 = arith.constant 0.707106769 : f32
    %9 = vector.broadcast %cst_7 : f32 to vector<16x128xf32>
    %10 = arith.mulf %6, %9 : vector<16x128xf32>
    %11 = math.erf %10 : vector<16x128xf32>
    %cst_8 = arith.constant 1.000000e+00 : f32
    %12 = vector.broadcast %cst_8 : f32 to vector<16x128xf32>
    %13 = arith.addf %12, %11 : vector<16x128xf32>
    %14 = arith.mulf %8, %13 : vector<16x128xf32>
    %c0_9 = arith.constant 0 : index
    %c0_10 = arith.constant 0 : index
    %15 = vector.load %arg4[%c0_9, %c0_10] : memref<128x32xf32, #tpu.memory_space<vmem>>, vector<128x32xf32>
    %cst_11 = arith.constant dense<0.000000e+00> : vector<16x32xf32>
    %16 = tpu.matmul %14, %15, %cst_11 {dimension_numbers = #tpu.dot_dimension_numbers<[1], [0], [0], [1], [0, 0, 1, 1], [], []>} : vector<16x128xf32>, vector<128x32xf32>, vector<16x32xf32> -> vector<16x32xf32>
    %17 = arith.addf %1, %16 : vector<16x32xf32>
    %c0_12 = arith.constant 0 : index
    %c0_13 = arith.constant 0 : index
    %18 = vector.load %arg5[%c0_12, %c0_13] : memref<1x32xf32, #tpu.memory_space<vmem>>, vector<1x32xf32>
    %19 = vector.broadcast %18 : vector<1x32xf32> to vector<16x32xf32>
    %20 = arith.addf %17, %19 : vector<16x32xf32>
    %c0_14 = arith.constant 0 : index
    %c0_15 = arith.constant 0 : index
    %21 = vector.load %arg6[%c0_14, %c0_15] : memref<16x32xf32, #tpu.memory_space<vmem>>, vector<16x32xf32>
    tpu.vector_store %arg6[%c0_14, %c0_15], %20 {strides = array<i32>} : memref<16x32xf32, #tpu.memory_space<vmem>>, vector<16x32xf32>,
    return
  }
  func.func @transform_0(%arg0: i32) -> (i32, i32) {
    %c0_i32 = arith.constant 0 : i32
    %c0_i32_0 = arith.constant 0 : i32
    return %arg0, %c0_i32 : i32, i32
  }
  func.func @transform_1(%arg0: i32) -> (i32, i32) {
    %c0_i32 = arith.constant 0 : i32
    %c0_i32_0 = arith.constant 0 : i32
    %c0_i32_1 = arith.constant 0 : i32
    return %c0_i32, %c0_i32_0 : i32, i32
  }
  func.func @transform_2(%arg0: i32) -> (i32, i32) {
    %c0_i32 = arith.constant 0 : i32
    %c0_i32_0 = arith.constant 0 : i32
    %c0_i32_1 = arith.constant 0 : i32
    return %c0_i32, %c0_i32_0 : i32, i32
  }
  func.func @transform_3(%arg0: i32) -> (i32, i32) {
    %c0_i32 = arith.constant 0 : i32
    %c0_i32_0 = arith.constant 0 : i32
    %c0_i32_1 = arith.constant 0 : i32
    return %c0_i32, %c0_i32_0 : i32, i32
  }
  func.func @transform_4(%arg0: i32) -> (i32, i32) {
    %c0_i32 = arith.constant 0 : i32
    %c0_i32_0 = arith.constant 0 : i32
    %c0_i32_1 = arith.constant 0 : i32
    return %c0_i32, %c0_i32_0 : i32, i32
  }
  func.func @transform_5(%arg0: i32) -> (i32, i32) {
    %c0_i32 = arith.constant 0 : i32
    %c0_i32_0 = arith.constant 0 : i32
    return %arg0, %c0_i32 : i32, i32
  }
}

</mosaic_0001>

<llo_original>
// kernel: tpu_custom_call.1
$region0: #{tpu_custom_call.1}
  #allocation0 [shape = 'u32[]', space=smem, size = 0x4, offset = 0x4, fixed_abs, tag = 'smem constant byte address 0x4 - core index']
  #allocation1 [shape = 'u32[72,128]{1,0:T(1,128)}', space=vmem, size = 0x9000, scoped, tag = 'internal scratch']
  %s0 = inlined_call_operand.vmem [shape: f32[16,32], index: 0, kind: input, shape index: {}]
  %s1 = inlined_call_operand.vmem [shape: f32[32,128], index: 1, kind: input, shape index: {}]
  %s2 = inlined_call_operand.vmem [shape: f32[1,128], index: 2, kind: input, shape index: {}]
  %s3 = inlined_call_operand.vmem [shape: f32[128,32], index: 3, kind: input, shape index: {}]
  %s4 = inlined_call_operand.vmem [shape: f32[1,32], index: 4, kind: input, shape index: {}]
  %s5 = inlined_call_operand.hbm [shape: f32[16,32], index: 5, kind: output, shape index: {}]
  %s6 = sld [smem:[#allocation0]]
  $region30: #{tpu_custom_call.1} parent=0
    _
  %s8 = ssub.s32 1, %s6
  %s9 = scalar_select 0, %s8, %s6
  $region1: #{tpu_custom_call.1} parent=0
    #allocation2 [shape = 'u8[8192]{0}', space=vmem, size = 0x2000, scoped, tag = 'output window, operand 0, single buffered']
    #allocation3 [shape = 's32[1]{0}', space=sflag, size = 0x4, scoped, tag = 'scoped memory for tpu_custom_call.1']
    %10 = vsyncpa [#allocation3], 0
    // Predicated region
    $region2: #{tpu_custom_call.1} parent=1 // pred_check
      _
    $region3: #{tpu_custom_call.1} parent=1 // pred_check_branch
      %12 = sbr.rel (0) target = $region5
    $region4: #{tpu_custom_call.1} parent=1 // pred_region
      _
    $region5: #{tpu_custom_call.1} parent=1 // pred_fallthru
      _
    // Predicated region
    $region6: #{tpu_custom_call.1} parent=1 // pred_check
      _
    $region7: #{tpu_custom_call.1} parent=1 // pred_check_branch
      %14 = sbr.rel (0) target = $region9
    $region8: #{tpu_custom_call.1} parent=1 // pred_region
      _
    $region9: #{tpu_custom_call.1} parent=1 // pred_fallthru
      _
    // Predicated region
    $region10: #{tpu_custom_call.1} parent=1 // pred_check
      _
    $region11: #{tpu_custom_call.1} parent=1 // pred_check_branch
      %16 = sbr.rel (0) target = $region13
    $region12: #{tpu_custom_call.1} parent=1 // pred_region
      _
    $region13: #{tpu_custom_call.1} parent=1 // pred_fallthru
      _
    // Predicated region
    $region14: #{tpu_custom_call.1} parent=1 // pred_check
      _
    $region15: #{tpu_custom_call.1} parent=1 // pred_check_branch
      %18 = sbr.rel (0) target = $region17
    $region16: #{tpu_custom_call.1} parent=1 // pred_region
      _
    $region17: #{tpu_custom_call.1} parent=1 // pred_fallthru
      _
    // Predicated region
    $region18: #{tpu_custom_call.1} parent=1 // pred_check
      _
    $region19: #{tpu_custom_call.1} parent=1 // pred_check_branch
      %20 = sbr.rel (0) target = $region21
    $region20: #{tpu_custom_call.1} parent=1 // pred_region
      _
    $region21: #{tpu_custom_call.1} parent=1 // pred_fallthru
      _
    %v21 = vld [vmem:[%s0] sm:$0xff]
    %v22 = vld [vmem:[%s0 + $0x8] sm:$0xff]
    %v23 = vld [vmem:[%s1] sm:$0xff]
    %v24 = vld [vmem:[%s1 + $0x8] sm:$0xff]
    %v25 = vld [vmem:[%s1 + $0x10] sm:$0xff]
    %v26 = vld [vmem:[%s1 + $0x18] sm:$0xff]
    %v27 = vld [vmem:[%s2] sm:$0x1]
    %v29 = vperm.slane %v27, 0
    %vm31 = vcmask 261120
    %v33 = vsel %vm31, %v21, 0
    %v36 = vsel %vm31, %v22, 0
    %38 = vmatpush.msra.mxu0 0.0
    %39 = vmatpush.msra.mxu0 0.0
    %40 = vmatpush.msra.mxu0 0.0
    %41 = vmatpush.msra.mxu0 0.0
    %42 = vmatpush.msra.mxu0 0.0
    %43 = vmatpush.msra.mxu0 0.0
    %44 = vmatpush.msra.mxu0 0.0
    %45 = vmatpush.msra.mxu0 0.0
    %46 = vmatpush.msra.mxu0 0.0
    %47 = vmatpush.msra.mxu0 0.0
    %48 = vmatpush.msra.mxu0 0.0
    %49 = vmatpush.msra.mxu0 0.0
    %50 = vmatpush.msra.mxu0 %v26
    %51 = vmatpush.msra.mxu0 %v25
    %52 = vmatpush.msra.mxu0 %v24
    %53 = vmatpush.msra.mxu0 %v23
    %54 = vmatmul.f32.gmra.mxu0 %v33
    %v55 = vpop.f32.mrf.mxu0
    %v56 = vadd.f32 %v29, %v55
    %57 = vmatmul.f32.gmra.mxu0 %v36
    %v58 = vpop.f32.mrf.mxu0
    %v59 = vadd.f32 %v29, %v58
    %60 = vdwg.mxu0
    %v61 = vmul.f32 %v56, 0.5
    %v62 = vmul.f32 %v59, 0.5
    %v63 = vmul.f32 %v56, 0.70710677
    %v64 = vmul.f32 %v59, 0.70710677
    %v65 = vmul.f32 %v63, %v63
    %v66 = vmin.f32 16.0, %v65
    %v67 = vmul.f32 %v66, 2.1237322e-06
    %v68 = vadd.f32 %v67, 0.00028619796
    %v69 = vmul.f32 %v66, %v68
    %v70 = vadd.f32 %v69, 0.0036580483
    %v71 = vmul.f32 %v66, %v70
    %v72 = vadd.f32 %v71, 0.05243302
    %v73 = vmul.f32 %v66, %v72
    %v74 = vadd.f32 %v73, 0.18741608
    %v75 = vmul.f32 %v66, %v74
    %v76 = vadd.f32 %v75, 1.1283791
    %v77 = vmul.f32 %v63, %v76
    %v78 = vmul.f32 %v66, 3.8918573e-05
    %v79 = vadd.f32 %v78, 0.001143296
    %v80 = vmul.f32 %v66, %v79
    %v81 = vadd.f32 %v80, 0.014752088
    %v82 = vmul.f32 %v66, %v81
    %v83 = vadd.f32 %v82, 0.112945676
    %v84 = vmul.f32 %v66, %v83
    %v85 = vadd.f32 %v84, 0.4994258
    %v86 = vmul.f32 %v66, %v85
    %v87 = vadd.f32 %v86, 1.0
    %v88 = vrcp.pop %v87
    %v89 = vmul.f32 %v87, %v88
    %v90 = vsub.f32 1.0, %v89
    %v91 = vmul.f32 %v88, %v90
    %v92 = vadd.f32 %v88, %v91
    %vm93 = vweird.f32 %v87
    %vm94 = vweird.f32 %v88
    %vm95 = vmor %vm93, %vm94
    %v96 = vsel %vm95, %v88, %v92
    %v97 = vand.u32 2147483647, %v87
    %vm98 = vcmp.eq.f32.partialorder %v97, 8.507059e+37
    %v99 = vand.u32 %v87, 2147483648
    %v100 = vor.u32 1.1754944e-38, %v99
    %v101 = vsel %vm98, %v100, %v96
    %v102 = vmul.f32 %v77, %v101
    %v103 = vmin.f32 %v102, 1.0
    %v104 = vmax.f32 %v103, -1.0
    %v105 = vmul.f32 %v64, %v64
    %v106 = vmin.f32 16.0, %v105
    %v107 = vmul.f32 %v106, 2.1237322e-06
    %v108 = vadd.f32 %v107, 0.00028619796
    %v109 = vmul.f32 %v106, %v108
    %v110 = vadd.f32 %v109, 0.0036580483
    %v111 = vmul.f32 %v106, %v110
    %v112 = vadd.f32 %v111, 0.05243302
    %v113 = vmul.f32 %v106, %v112
    %v114 = vadd.f32 %v113, 0.18741608
    %v115 = vmul.f32 %v106, %v114
    %v116 = vadd.f32 %v115, 1.1283791
    %v117 = vmul.f32 %v64, %v116
    %v118 = vmul.f32 %v106, 3.8918573e-05
    %v119 = vadd.f32 %v118, 0.001143296
    %v120 = vmul.f32 %v106, %v119
    %v121 = vadd.f32 %v120, 0.014752088
    %v122 = vmul.f32 %v106, %v121
    %v123 = vadd.f32 %v122, 0.112945676
    %v124 = vmul.f32 %v106, %v123
    %v125 = vadd.f32 %v124, 0.4994258
    %v126 = vmul.f32 %v106, %v125
    %v127 = vadd.f32 %v126, 1.0
    %v128 = vrcp.pop %v127
    %v129 = vmul.f32 %v127, %v128
    %v130 = vsub.f32 1.0, %v129
    %v131 = vmul.f32 %v128, %v130
    %v132 = vadd.f32 %v128, %v131
    %vm133 = vweird.f32 %v127
    %vm134 = vweird.f32 %v128
    %vm135 = vmor %vm133, %vm134
    %v136 = vsel %vm135, %v128, %v132
    %v137 = vand.u32 2147483647, %v127
    %vm138 = vcmp.eq.f32.partialorder %v137, 8.507059e+37
    %v139 = vand.u32 %v127, 2147483648
    %v140 = vor.u32 1.1754944e-38, %v139
    %v141 = vsel %vm138, %v140, %v136
    %v142 = vmul.f32 %v117, %v141
    %v143 = vmin.f32 %v142, 1.0
    %v144 = vmax.f32 %v143, -1.0
    %v145 = vadd.f32 %v104, 1.0
    %v146 = vadd.f32 %v144, 1.0
    %v147 = vmul.f32 %v61, %v145
    %v148 = vmul.f32 %v62, %v146
    %v149 = vld [vmem:[%s3] sm:$0xff]
    %v150 = vld [vmem:[%s3 + $0x8] sm:$0xff]
    %v151 = vld [vmem:[%s3 + $0x10] sm:$0xff]
    %v152 = vld [vmem:[%s3 + $0x18] sm:$0xff]
    %v153 = vld [vmem:[%s3 + $0x20] sm:$0xff]
    %v154 = vld [vmem:[%s3 + $0x28] sm:$0xff]
    %v155 = vld [vmem:[%s3 + $0x30] sm:$0xff]
    %v156 = vld [vmem:[%s3 + $0x38] sm:$0xff]
    %v157 = vld [vmem:[%s3 + $0x40] sm:$0xff]
    %v158 = vld [vmem:[%s3 + $0x48] sm:$0xff]
    %v159 = vld [vmem:[%s3 + $0x50] sm:$0xff]
    %v160 = vld [vmem:[%s3 + $0x58] sm:$0xff]
    %v161 = vld [vmem:[%s3 + $0x60] sm:$0xff]
    %v162 = vld [vmem:[%s3 + $0x68] sm:$0xff]
    %v163 = vld [vmem:[%s3 + $0x70] sm:$0xff]
    %v164 = vld [vmem:[%s3 + $0x78] sm:$0xff]
    %v165 = vld [vmem:[%s4] sm:$0x1]
    %v167 = vperm.slane %v165, 0
    %169 = vmatpush.msra.mxu0 %v164
    %170 = vmatpush.msra.mxu0 %v163
    %171 = vmatpush.msra.mxu0 %v162
    %172 = vmatpush.msra.mxu0 %v161
    %173 = vmatpush.msra.mxu0 %v160
    %174 = vmatpush.msra.mxu0 %v159
    %175 = vmatpush.msra.mxu0 %v158
    %176 = vmatpush.msra.mxu0 %v157
    %177 = vmatpush.msra.mxu0 %v156
    %178 = vmatpush.msra.mxu0 %v155
    %179 = vmatpush.msra.mxu0 %v154
    %180 = vmatpush.msra.mxu0 %v153
    %181 = vmatpush.msra.mxu0 %v152
    %182 = vmatpush.msra.mxu0 %v151
    %183 = vmatpush.msra.mxu0 %v150
    %184 = vmatpush.msra.mxu0 %v149
    %185 = vmatmul.f32.gmra.mxu0 %v147
    %v186 = vpop.f32.mrf.mxu0
    %v187 = vadd.f32 %v167, %v186
    %188 = vmatmul.f32.gmra.mxu0 %v148
    %v189 = vpop.f32.mrf.mxu0
    %v190 = vadd.f32 %v167, %v189
    %191 = vdwg.mxu0
    %192 = vst.msk [vmem:[#allocation2] sm:$0xff] %vm31, %v187
    %193 = vst.msk [vmem:[#allocation2 + $0x8] sm:$0xff] %vm31, %v190
    // Predicated region
    $region22: #{tpu_custom_call.1} parent=1 // pred_check
      _
    $region23: #{tpu_custom_call.1} parent=1 // pred_check_branch
      %195 = sbr.rel (0) target = $region25
    $region24: #{tpu_custom_call.1} parent=1 // pred_region
      %197 = vsyncadd [#allocation3], 0
      %s198 = sshll.u32 [#allocation2], 4
      %s199 = int_to_ptr.vmem [resolvable:$true] %s198
      %s200 = sshll.u32 %s5, 4
      %s201 = int_to_ptr.hbm [resolvable:$true] %s200
      %206 = dma.vmem_to_hbm [thread:$0]  %s199, 256, %s201, [#allocation3], 128, 128, 8
    $region25: #{tpu_custom_call.1} parent=1 // pred_fallthru
      _
    // Predicated region
    $region26: #{tpu_custom_call.1} parent=1 // pred_check
      _
    $region27: #{tpu_custom_call.1} parent=1 // pred_check_branch
      %208 = sbr.rel (0) target = $region29
    $region28: #{tpu_custom_call.1} parent=1 // pred_region
      %210 = dma.done [#allocation3], 256
    $region29: #{tpu_custom_call.1} parent=1 // pred_fallthru
      _
    %211 = vsyncpa [#allocation3], 1

// kernel: tpu_custom_call.1
$region0: #{tpu_custom_call.1}
  #allocation0 [shape = 'u32[]', space=smem, size = 0x4, offset = 0x4, fixed_abs, tag = 'smem constant byte address 0x4 - core index']
  #allocation1 [shape = 'u32[72,128]{1,0:T(1,128)}', space=vmem, size = 0x9000, scoped, tag = 'internal scratch']
  %s0 = inlined_call_operand.vmem [shape: f32[16,32], index: 0, kind: input, shape index: {}]
  %s1 = inlined_call_operand.vmem [shape: f32[32,128], index: 1, kind: input, shape index: {}]
  %s2 = inlined_call_operand.vmem [shape: f32[1,128], index: 2, kind: input, shape index: {}]
  %s3 = inlined_call_operand.vmem [shape: f32[128,32], index: 3, kind: input, shape index: {}]
  %s4 = inlined_call_operand.vmem [shape: f32[1,32], index: 4, kind: input, shape index: {}]
  %s5 = inlined_call_operand.hbm [shape: f32[16,32], index: 5, kind: output, shape index: {}]
  %s6 = sld [smem:[#allocation0]]
  $region30: #{tpu_custom_call.1} parent=0
    _
  %s8 = ssub.s32 1, %s6
  %s9 = scalar_select 0, %s8, %s6
  $region1: #{tpu_custom_call.1} parent=0
    #allocation2 [shape = 'u8[8192]{0}', space=vmem, size = 0x2000, scoped, tag = 'output window, operand 0, single buffered']
    #allocation3 [shape = 's32[1]{0}', space=sflag, size = 0x4, scoped, tag = 'scoped memory for tpu_custom_call.1']
    %10 = vsyncpa [#allocation3], 0
    // Predicated region
    $region2: #{tpu_custom_call.1} parent=1 // pred_check
      _
    $region3: #{tpu_custom_call.1} parent=1 // pred_check_branch
      %12 = sbr.rel (0) target = $region5
    $region4: #{tpu_custom_call.1} parent=1 // pred_region
      _
    $region5: #{tpu_custom_call.1} parent=1 // pred_fallthru
      _
    // Predicated region
    $region6: #{tpu_custom_call.1} parent=1 // pred_check
      _
    $region7: #{tpu_custom_call.1} parent=1 // pred_check_branch
      %14 = sbr.rel (0) target = $region9
    $region8: #{tpu_custom_call.1} parent=1 // pred_region
      _
    $region9: #{tpu_custom_call.1} parent=1 // pred_fallthru
      _
    // Predicated region
    $region10: #{tpu_custom_call.1} parent=1 // pred_check
      _
    $region11: #{tpu_custom_call.1} parent=1 // pred_check_branch
      %16 = sbr.rel (0) target = $region13
    $region12: #{tpu_custom_call.1} parent=1 // pred_region
      _
    $region13: #{tpu_custom_call.1} parent=1 // pred_fallthru
      _
    // Predicated region
    $region14: #{tpu_custom_call.1} parent=1 // pred_check
      _
    $region15: #{tpu_custom_call.1} parent=1 // pred_check_branch
      %18 = sbr.rel (0) target = $region17
    $region16: #{tpu_custom_call.1} parent=1 // pred_region
      _
    $region17: #{tpu_custom_call.1} parent=1 // pred_fallthru
      _
    // Predicated region
    $region18: #{tpu_custom_call.1} parent=1 // pred_check
      _
    $region19: #{tpu_custom_call.1} parent=1 // pred_check_branch
      %20 = sbr.rel (0) target = $region21
    $region20: #{tpu_custom_call.1} parent=1 // pred_region
      _
    $region21: #{tpu_custom_call.1} parent=1 // pred_fallthru
      _
    %v21 = vld [vmem:[%s0] sm:$0xff]
    %v22 = vld [vmem:[%s0 + $0x8] sm:$0xff]
    %v23 = vld [vmem:[%s1] sm:$0xff]
    %v24 = vld [vmem:[%s1 + $0x8] sm:$0xff]
    %v25 = vld [vmem:[%s1 + $0x10] sm:$0xff]
    %v26 = vld [vmem:[%s1 + $0x18] sm:$0xff]
    %v27 = vld [vmem:[%s2] sm:$0x1]
    %v29 = vperm.slane %v27, 0
    %vm31 = vcmask 261120
    %v33 = vsel %vm31, %v21, 0
    %v36 = vsel %vm31, %v22, 0
    %38 = vmatpush.msra.mxu0 0.0
    %39 = vmatpush.msra.mxu0 0.0
    %40 = vmatpush.msra.mxu0 0.0
    %41 = vmatpush.msra.mxu0 0.0
    %42 = vmatpush.msra.mxu0 0.0
    %43 = vmatpush.msra.mxu0 0.0
    %44 = vmatpush.msra.mxu0 0.0
    %45 = vmatpush.msra.mxu0 0.0
    %46 = vmatpush.msra.mxu0 0.0
    %47 = vmatpush.msra.mxu0 0.0
    %48 = vmatpush.msra.mxu0 0.0
    %49 = vmatpush.msra.mxu0 0.0
    %50 = vmatpush.msra.mxu0 %v26
    %51 = vmatpush.msra.mxu0 %v25
    %52 = vmatpush.msra.mxu0 %v24
    %53 = vmatpush.msra.mxu0 %v23
    %54 = vmatmul.f32.gmra.mxu0 %v33
    %v55 = vpop.f32.mrf.mxu0
    %v56 = vadd.f32 %v29, %v55
    %57 = vmatmul.f32.gmra.mxu0 %v36
    %v58 = vpop.f32.mrf.mxu0
    %v59 = vadd.f32 %v29, %v58
    %60 = vdwg.mxu0
    %v61 = vmul.f32 %v56, 0.5
    %v62 = vmul.f32 %v59, 0.5
    %v63 = vmul.f32 %v56, 0.70710677
    %v64 = vmul.f32 %v59, 0.70710677
    %v65 = vmul.f32 %v63, %v63
    %v66 = vmin.f32 16.0, %v65
    %v67 = vmul.f32 %v66, 2.1237322e-06
    %v68 = vadd.f32 %v67, 0.00028619796
    %v69 = vmul.f32 %v66, %v68
    %v70 = vadd.f32 %v69, 0.0036580483
    %v71 = vmul.f32 %v66, %v70
    %v72 = vadd.f32 %v71, 0.05243302
    %v73 = vmul.f32 %v66, %v72
    %v74 = vadd.f32 %v73, 0.18741608
    %v75 = vmul.f32 %v66, %v74
    %v76 = vadd.f32 %v75, 1.1283791
    %v77 = vmul.f32 %v63, %v76
    %v78 = vmul.f32 %v66, 3.8918573e-05
    %v79 = vadd.f32 %v78, 0.001143296
    %v80 = vmul.f32 %v66, %v79
    %v81 = vadd.f32 %v80, 0.014752088
    %v82 = vmul.f32 %v66, %v81
    %v83 = vadd.f32 %v82, 0.112945676
    %v84 = vmul.f32 %v66, %v83
    %v85 = vadd.f32 %v84, 0.4994258
    %v86 = vmul.f32 %v66, %v85
    %v87 = vadd.f32 %v86, 1.0
    %v88 = vrcp.pop %v87
    %v89 = vmul.f32 %v87, %v88
    %v90 = vsub.f32 1.0, %v89
    %v91 = vmul.f32 %v88, %v90
    %v92 = vadd.f32 %v88, %v91
    %vm93 = vweird.f32 %v87
    %vm94 = vweird.f32 %v88
    %vm95 = vmor %vm93, %vm94
    %v96 = vsel %vm95, %v88, %v92
    %v97 = vand.u32 2147483647, %v87
    %vm98 = vcmp.eq.f32.partialorder %v97, 8.507059e+37
    %v99 = vand.u32 %v87, 2147483648
    %v100 = vor.u32 1.1754944e-38, %v99
    %v101 = vsel %vm98, %v100, %v96
    %v102 = vmul.f32 %v77, %v101
    %v103 = vmin.f32 %v102, 1.0
    %v104 = vmax.f32 %v103, -1.0
    %v105 = vmul.f32 %v64, %v64
    %v106 = vmin.f32 16.0, %v105
    %v107 = vmul.f32 %v106, 2.1237322e-06
    %v108 = vadd.f32 %v107, 0.00028619796
    %v109 = vmul.f32 %v106, %v108
    %v110 = vadd.f32 %v109, 0.0036580483
    %v111 = vmul.f32 %v106, %v110
    %v112 = vadd.f32 %v111, 0.05243302
    %v113 = vmul.f32 %v106, %v112
    %v114 = vadd.f32 %v113, 0.18741608
    %v115 = vmul.f32 %v106, %v114
    %v116 = vadd.f32 %v115, 1.1283791
    %v117 = vmul.f32 %v64, %v116
    %v118 = vmul.f32 %v106, 3.8918573e-05
    %v119 = vadd.f32 %v118, 0.001143296
    %v120 = vmul.f32 %v106, %v119
    %v121 = vadd.f32 %v120, 0.014752088
    %v122 = vmul.f32 %v106, %v121
    %v123 = vadd.f32 %v122, 0.112945676
    %v124 = vmul.f32 %v106, %v123
    %v125 = vadd.f32 %v124, 0.4994258
    %v126 = vmul.f32 %v106, %v125
    %v127 = vadd.f32 %v126, 1.0
    %v128 = vrcp.pop %v127
    %v129 = vmul.f32 %v127, %v128
    %v130 = vsub.f32 1.0, %v129
    %v131 = vmul.f32 %v128, %v130
    %v132 = vadd.f32 %v128, %v131
    %vm133 = vweird.f32 %v127
    %vm134 = vweird.f32 %v128
    %vm135 = vmor %vm133, %vm134
    %v136 = vsel %vm135, %v128, %v132
    %v137 = vand.u32 2147483647, %v127
    %vm138 = vcmp.eq.f32.partialorder %v137, 8.507059e+37
    %v139 = vand.u32 %v127, 2147483648
    %v140 = vor.u32 1.1754944e-38, %v139
    %v141 = vsel %vm138, %v140, %v136
    %v142 = vmul.f32 %v117, %v141
    %v143 = vmin.f32 %v142, 1.0
    %v144 = vmax.f32 %v143, -1.0
    %v145 = vadd.f32 %v104, 1.0
    %v146 = vadd.f32 %v144, 1.0
    %v147 = vmul.f32 %v61, %v145
    %v148 = vmul.f32 %v62, %v146
    %v149 = vld [vmem:[%s3] sm:$0xff]
    %v150 = vld [vmem:[%s3 + $0x8] sm:$0xff]
    %v151 = vld [vmem:[%s3 + $0x10] sm:$0xff]
    %v152 = vld [vmem:[%s3 + $0x18] sm:$0xff]
    %v153 = vld [vmem:[%s3 + $0x20] sm:$0xff]
    %v154 = vld [vmem:[%s3 + $0x28] sm:$0xff]
    %v155 = vld [vmem:[%s3 + $0x30] sm:$0xff]
    %v156 = vld [vmem:[%s3 + $0x38] sm:$0xff]
    %v157 = vld [vmem:[%s3 + $0x40] sm:$0xff]
    %v158 = vld [vmem:[%s3 + $0x48] sm:$0xff]
    %v159 = vld [vmem:[%s3 + $0x50] sm:$0xff]
    %v160 = vld [vmem:[%s3 + $0x58] sm:$0xff]
    %v161 = vld [vmem:[%s3 + $0x60] sm:$0xff]
    %v162 = vld [vmem:[%s3 + $0x68] sm:$0xff]
    %v163 = vld [vmem:[%s3 + $0x70] sm:$0xff]
    %v164 = vld [vmem:[%s3 + $0x78] sm:$0xff]
    %v165 = vld [vmem:[%s4] sm:$0x1]
    %v167 = vperm.slane %v165, 0
    %169 = vmatpush.msra.mxu0 %v164
    %170 = vmatpush.msra.mxu0 %v163
    %171 = vmatpush.msra.mxu0 %v162
    %172 = vmatpush.msra.mxu0 %v161
    %173 = vmatpush.msra.mxu0 %v160
    %174 = vmatpush.msra.mxu0 %v159
    %175 = vmatpush.msra.mxu0 %v158
    %176 = vmatpush.msra.mxu0 %v157
    %177 = vmatpush.msra.mxu0 %v156
    %178 = vmatpush.msra.mxu0 %v155
    %179 = vmatpush.msra.mxu0 %v154
    %180 = vmatpush.msra.mxu0 %v153
    %181 = vmatpush.msra.mxu0 %v152
    %182 = vmatpush.msra.mxu0 %v151
    %183 = vmatpush.msra.mxu0 %v150
    %184 = vmatpush.msra.mxu0 %v149
    %185 = vmatmul.f32.gmra.mxu0 %v147
    %v186 = vpop.f32.mrf.mxu0
    %v187 = vadd.f32 %v167, %v186
    %188 = vmatmul.f32.gmra.mxu0 %v148
    %v189 = vpop.f32.mrf.mxu0
    %v190 = vadd.f32 %v167, %v189
    %191 = vdwg.mxu0
    %192 = vst.msk [vmem:[#allocation2] sm:$0xff] %vm31, %v187
    %193 = vst.msk [vmem:[#allocation2 + $0x8] sm:$0xff] %vm31, %v190
    // Predicated region
    $region22: #{tpu_custom_call.1} parent=1 // pred_check
      _
    $region23: #{tpu_custom_call.1} parent=1 // pred_check_branch
      %195 = sbr.rel (0) target = $region25
    $region24: #{tpu_custom_call.1} parent=1 // pred_region
      %197 = vsyncadd [#allocation3], 0
      %s198 = sshll.u32 [#allocation2], 4
      %s199 = int_to_ptr.vmem [resolvable:$true] %s198
      %s200 = sshll.u32 %s5, 4
      %s201 = int_to_ptr.hbm [resolvable:$true] %s200
      %206 = dma.vmem_to_hbm [thread:$0]  %s199, 256, %s201, [#allocation3], 128, 128, 8
    $region25: #{tpu_custom_call.1} parent=1 // pred_fallthru
      _
    // Predicated region
    $region26: #{tpu_custom_call.1} parent=1 // pred_check
      _
    $region27: #{tpu_custom_call.1} parent=1 // pred_check_branch
      %208 = sbr.rel (0) target = $region29
    $region28: #{tpu_custom_call.1} parent=1 // pred_region
      %210 = dma.done [#allocation3], 256
    $region29: #{tpu_custom_call.1} parent=1 // pred_fallthru
      _
    %211 = vsyncpa [#allocation3], 1

</llo_original>
